<compile_context>
chip_gen: v7x
topology: tpu7x:2x2x1
jax: 0.10.0
libtpu: 0.0.40
codegen_flags: <defaults>
</compile_context>

<pallas_src>
import math
import numpy as np
import jax
import jax.numpy as jnp
from jax.experimental import pallas as pl
from jax.experimental.pallas import tpu as pltpu


def _round_up(x, m):
    return ((x + m - 1) // m) * m


# ----------------------------- Pallas kernel --------------------------------
def _make_kernel(input_dim, compressed_dim, hidden_dim, out_pad):
    half = hidden_dim // 2
    cd = compressed_dim

    def layernorm(x, gamma, beta, eps=1e-5):
        # one-pass statistics: var = E[x^2] - mean^2 (2 independent reductions)
        mean = jnp.mean(x, axis=-1, keepdims=True)
        meansq = jnp.mean(x * x, axis=-1, keepdims=True)
        var = jnp.maximum(meansq - mean * mean, 0.0)
        return (x - mean) * jax.lax.rsqrt(var + eps) * gamma + beta

    def lrelu(x, slope=0.2):
        return jnp.where(x > 0, x, slope * x)

    def dot_bf16(a, w_ref):
        # bf16 operands, f32 accumulation on the MXU
        return jnp.dot(a.astype(jnp.bfloat16), w_ref[...],
                       preferred_element_type=jnp.float32)

    def kernel(xe_ref,
               w1_ref, w2_ref, wml_ref, wd1_ref, wd2_ref, wd3p_ref, wmlp_ref,
               pvec_ref,
               out_ref):
        # small parameter vectors: rows of the consolidated buffer, hoisted once
        b1 = pvec_ref[0:1, :hidden_dim]
        g1 = pvec_ref[1:2, :hidden_dim]
        be1 = pvec_ref[2:3, :hidden_dim]
        b2 = pvec_ref[3:4, :half]
        g2 = pvec_ref[4:5, :half]
        be2 = pvec_ref[5:6, :half]
        bml = pvec_ref[6:7, :2 * cd]             # fused [b_mu | b_logvar]
        bd1 = pvec_ref[7:8, :half]
        gd1 = pvec_ref[8:9, :half]
        bed1 = pvec_ref[9:10, :half]
        bd2 = pvec_ref[10:11, :hidden_dim]
        gd2 = pvec_ref[11:12, :hidden_dim]
        bed2 = pvec_ref[12:13, :hidden_dim]
        bout = pvec_ref[13:14, :out_pad]         # [bd3 | b_mu|b_logvar | 0...]

        x = xe_ref[:, :input_dim]                        # bf16
        eps = xe_ref[:, input_dim:].astype(jnp.float32)  # reparam noise

        # ---- encoder ----
        h = dot_bf16(x, w1_ref) + b1
        h = lrelu(layernorm(h, g1, be1))
        h = dot_bf16(h, w2_ref) + b2
        h = lrelu(layernorm(h, g2, be2))

        # ---- fused latent heads (z path): one matmul -> [mu | logvar] ----
        mulv = dot_bf16(h, wml_ref) + bml
        mu = mulv[:, :cd]
        lv = mulv[:, cd:]

        # ---- reparameterize: z = mu + eps * exp(0.5 * logvar) ----
        z = mu + eps * jnp.exp(0.5 * lv)

        # ---- decoder ----
        d = dot_bf16(z, wd1_ref) + bd1
        d = lrelu(layernorm(d, gd1, bed1))
        d = dot_bf16(d, wd2_ref) + bd2
        d = lrelu(layernorm(d, gd2, bed2))

        # ---- 128-lane-dense packed output, assembled on the MXU ----
        # wd3p: decoder weights in output columns [0, input_dim), zeros elsewhere.
        # wmlp: mu|logvar head re-emitted into columns [input_dim, input_dim+2cd).
        # Their sum + bout gives [rec | mu | logvar | 0...]; one unmasked full-width
        # store per row group, no concatenate / lane shifts / masked vst.
        out_ref[...] = dot_bf16(d, wd3p_ref) + dot_bf16(h, wmlp_ref) + bout

    return kernel


# ------------------------------- wrapper -------------------------------------
def _pick_batch_tile(B, tb_max):
    # Big tiles amortize the ~0.35us per-grid-step cost, but aim for >=2 grid
    # steps whenever B allows so v7x's 2 TensorCores both get work.  Sweep
    # tb_max in {256, 512, 1024} when tuning.
    if B <= 8:
        TB = 8
    else:
        TB = max(8, min(tb_max, _round_up(pl.cdiv(B, 2), 8)))
    return TB, _round_up(B, TB)


def vae_forward(x, eps, params, *, tb_max=1024):
    """Full VAE forward in one Pallas kernel, batch-tiled over a 1-D grid.

    x:   [B, input_dim]      float32
    eps: [B, compressed_dim] float32 (reparameterization noise)
    Returns (reconstructed [B, input_dim], mu [B, cd], logvar [B, cd]) in f32.
    """
    w1, w2, wml, wd1, wd2, wd3p, wmlp, pvec, dims = params
    input_dim, cd, hidden_dim, out_logical, out_pad, _pw = dims
    B = x.shape[0]
    xe_width = input_dim + cd

    TB, B_pad = _pick_batch_tile(B, tb_max)

    # fold eps into x: one bf16 input [x | eps] -> one wider, cheaper DMA per tile
    xe = jnp.concatenate([x, eps], axis=-1).astype(jnp.bfloat16)
    if B_pad != B:
        xe = jnp.pad(xe, ((0, B_pad - B), (0, 0)))

    kernel = _make_kernel(input_dim, cd, hidden_dim, out_pad)

    def batch_spec(width):
        return pl.BlockSpec((TB, width), lambda i: (i, 0))

    def resident_spec(arr):
        # full array, same block every grid step -> DMA'd once, stays in VMEM
        return pl.BlockSpec(arr.shape, lambda i: (0, 0))

    weights = (w1, w2, wml, wd1, wd2, wd3p, wmlp, pvec)
    in_specs = [batch_spec(xe_width)] + [resident_spec(w) for w in weights]

    # VMEM estimate with generous headroom (tiny kernel; don't starve neighbors)
    resident_bytes = sum(int(np.prod(w.shape)) * w.dtype.itemsize for w in weights)
    tile_bytes = 2 * (TB * xe_width * 2 + TB * out_pad * 4)   # double-buffered io
    vmem_limit = int(min(64 * 2**20, max(8 * 2**20, 4 * (resident_bytes + tile_bytes))))

    out = pl.pallas_call(
        kernel,
        out_shape=jax.ShapeDtypeStruct((B_pad, out_pad), jnp.float32),
        grid=(B_pad // TB,),
        in_specs=in_specs,
        out_specs=batch_spec(out_pad),
        compiler_params=pltpu.CompilerParams(
            dimension_semantics=("parallel",),   # megacore / 2-TC split on v7x
            vmem_limit_bytes=vmem_limit,
        ),
    )(xe, *weights)

    # wrapper slice offsets use the LOGICAL widths (padded lanes are discarded)
    rec = out[:B, :input_dim]
    mu = out[:B, input_dim:input_dim + cd]
    lv = out[:B, input_dim + cd:input_dim + 2 * cd]
    return rec, mu, lv


# -------------------------- deterministic params ------------------------------
def xavier_normal(key, fan_in, fan_out, gain=0.7):
    std = gain * math.sqrt(2.0 / (fan_in + fan_out))
    # stored as [in, out] so the kernel computes x @ W (+ b)
    return jax.random.normal(key, (fan_in, fan_out), dtype=jnp.float32) * std


def make_params(key, input_dim, compressed_dim, hidden_dim):
    half = hidden_dim // 2
    cd = compressed_dim
    out_logical = input_dim + 2 * cd
    out_pad = _round_up(out_logical, 128)                         # lane-dense output
    pw = _round_up(max(hidden_dim, input_dim, out_logical), 128)  # pvec lane width

    keys = jax.random.split(key, 7)
    w1 = xavier_normal(keys[0], input_dim, hidden_dim)
    w2 = xavier_normal(keys[1], hidden_dim, half)
    wmu = xavier_normal(keys[2], half, cd)
    wlv = xavier_normal(keys[3], half, cd)
    wd1 = xavier_normal(keys[4], cd, half)
    wd2 = xavier_normal(keys[5], half, hidden_dim)
    wd3 = xavier_normal(keys[6], hidden_dim, input_dim)

    wml = jnp.concatenate([wmu, wlv], axis=1)   # fused mu|logvar head (z path)

    # output-head weights, zero-padded into the 128-lane-dense packed layout
    wd3p = jnp.zeros((hidden_dim, out_pad), jnp.float32).at[:, :input_dim].set(wd3)
    wmlp = jnp.zeros((half, out_pad), jnp.float32).at[:, input_dim:out_logical].set(wml)

    # Consolidated parameter buffer: 14 rows x pw lanes, f32.
    # Rows: b1,g1,be1, b2,g2,be2, b_mu|b_lv, bd1,gd1,bed1, bd2,gd2,bed2,
    #       out_bias = [bd3 | b_mu|b_lv | 0...].
    # Biases are zero (PyTorch zeros_ init), LN gamma=1, LN beta=0.
    pvec_np = np.zeros((14, pw), np.float32)
    for row, n in ((1, hidden_dim), (4, half), (8, half), (11, hidden_dim)):
        pvec_np[row, :n] = 1.0  # LN gamma rows
    pvec = jnp.asarray(pvec_np)

    bf16 = lambda w: w.astype(jnp.bfloat16)
    dims = (input_dim, cd, hidden_dim, out_logical, out_pad, pw)
    return (bf16(w1), bf16(w2), bf16(wml), bf16(wd1), bf16(wd2),
            bf16(wd3p), bf16(wmlp), pvec, dims)


# --------------------------- pure-JAX reference -------------------------------
def vae_forward_ref(x, eps, params):
    """Matched-precision reference (same bf16 matmul operands, f32 accumulation,
    two-pass LayerNorm) for a tight correctness check of the kernel."""
    w1, w2, wml, wd1, wd2, wd3p, wmlp, pvec, dims = params
    input_dim, cd, hidden, out_logical, out_pad, _pw = dims
    half = hidden // 2

    def row(r, n):
        return pvec[r:r + 1, :n]

    def ln(v, g, b):
        m = jnp.mean(v, -1, keepdims=True)
        var = jnp.mean((v - m) ** 2, -1, keepdims=True)
        return (v - m) / jnp.sqrt(var + 1e-5) * g + b

    def lrelu(v):
        return jnp.where(v > 0, v, 0.2 * v)

    def mm(a, w):
        return jnp.dot(a.astype(jnp.bfloat16), w, preferred_element_type=jnp.float32)

    xb = x.astype(jnp.bfloat16)
    eb = eps.astype(jnp.bfloat16).astype(jnp.float32)  # matches packed bf16 input

    h = lrelu(ln(mm(xb, w1) + row(0, hidden), row(1, hidden), row(2, hidden)))
    h = lrelu(ln(mm(h, w2) + row(3, half), row(4, half), row(5, half)))
    mulv = mm(h, wml) + row(6, 2 * cd)
    mu, lv = mulv[:, :cd], mulv[:, cd:]
    z = mu + eb * jnp.exp(0.5 * lv)
    d = lrelu(ln(mm(z, wd1) + row(7, half), row(8, half), row(9, half)))
    d = lrelu(ln(mm(d, wd2) + row(10, hidden), row(11, hidden), row(12, hidden)))
    rec = (mm(d, wd3p) + pvec[13:14, :out_pad])[:, :input_dim]
    return rec, mu, lv


# ---------------------------------- main --------------------------------------
if __name__ == "__main__":
    input_dim = 32
    compressed_dim = 8
    hidden_dim = min(1024, input_dim * 2)   # = 64, matches the module's __init__
    batch = 8

    key = jax.random.PRNGKey(0)
    kx, keps, kp = jax.random.split(key, 3)

    x = jax.random.normal(kx, (batch, input_dim), dtype=jnp.float32)
    # TODO(synk): torch.randn_like noise inside reparameterize() has no in-kernel
    # equivalent tied to torch RNG; it is drawn deterministically here and fed in.
    eps = jax.random.normal(keps, (batch, compressed_dim), dtype=jnp.float32)

    params = make_params(kp, input_dim, compressed_dim, hidden_dim)

    rec, mu, lv = vae_forward(x, eps, params)
    jax.block_until_ready((rec, mu, lv))

    rec_r, mu_r, lv_r = vae_forward_ref(x, eps, params)
    # matmul operands match exactly; remaining diffs are one-pass-vs-two-pass LN
    # and exp/rsqrt numerics -> tight but not bit-exact tolerance
    assert np.allclose(np.asarray(rec), np.asarray(rec_r), atol=5e-3, rtol=5e-3)
    assert np.allclose(np.asarray(mu), np.asarray(mu_r), atol=5e-3, rtol=5e-3)
    assert np.allclose(np.asarray(lv), np.asarray(lv_r), atol=5e-3, rtol=5e-3)

    print("KERNEL_OK")
</pallas_src>

<mosaic_0001>
module attributes {stable_mosaic.version = 11 : i64} {
  func.func @kernel(%arg0: i32, %arg1: memref<8x40xbf16, #tpu.memory_space<vmem>>, %arg2: memref<32x64xbf16, #tpu.memory_space<vmem>>, %arg3: memref<64x32xbf16, #tpu.memory_space<vmem>>, %arg4: memref<32x16xbf16, #tpu.memory_space<vmem>>, %arg5: memref<8x32xbf16, #tpu.memory_space<vmem>>, %arg6: memref<32x64xbf16, #tpu.memory_space<vmem>>, %arg7: memref<64x128xbf16, #tpu.memory_space<vmem>>, %arg8: memref<32x128xbf16, #tpu.memory_space<vmem>>, %arg9: memref<14x128xf32, #tpu.memory_space<vmem>>, %arg10: memref<8x128xf32, #tpu.memory_space<vmem>>) attributes {dimension_semantics = [#tpu.dimension_semantics<parallel>], iteration_bounds = array<i64: 1>, scalar_prefetch = 0 : i64, scratch_operands = 0 : i64, tpu.core_type = #tpu.core_type<tc>, window_params = [{transform_indices = @transform_0, window_bounds = array<i64: 8, 40>}, {pipeline_mode = #tpu.pipeline_mode<synchronous>, transform_indices = @transform_1, window_bounds = array<i64: 32, 64>}, {pipeline_mode = #tpu.pipeline_mode<synchronous>, transform_indices = @transform_2, window_bounds = array<i64: 64, 32>}, {pipeline_mode = #tpu.pipeline_mode<synchronous>, transform_indices = @transform_3, window_bounds = array<i64: 32, 16>}, {pipeline_mode = #tpu.pipeline_mode<synchronous>, transform_indices = @transform_4, window_bounds = array<i64: 8, 32>}, {pipeline_mode = #tpu.pipeline_mode<synchronous>, transform_indices = @transform_5, window_bounds = array<i64: 32, 64>}, {pipeline_mode = #tpu.pipeline_mode<synchronous>, transform_indices = @transform_6, window_bounds = array<i64: 64, 128>}, {pipeline_mode = #tpu.pipeline_mode<synchronous>, transform_indices = @transform_7, window_bounds = array<i64: 32, 128>}, {pipeline_mode = #tpu.pipeline_mode<synchronous>, transform_indices = @transform_8, window_bounds = array<i64: 14, 128>}, {transform_indices = @transform_9, window_bounds = array<i64: 8, 128>}]} {
    %c0 = arith.constant 0 : index
    %c0_0 = arith.constant 0 : index
    %0 = vector.load %arg9[%c0, %c0_0] : memref<14x128xf32, #tpu.memory_space<vmem>>, vector<1x64xf32>
    %c1 = arith.constant 1 : index
    %c0_1 = arith.constant 0 : index
    %1 = vector.load %arg9[%c1, %c0_1] : memref<14x128xf32, #tpu.memory_space<vmem>>, vector<1x64xf32>
    %c2 = arith.constant 2 : index
    %c0_2 = arith.constant 0 : index
    %2 = vector.load %arg9[%c2, %c0_2] : memref<14x128xf32, #tpu.memory_space<vmem>>, vector<1x64xf32>
    %c3 = arith.constant 3 : index
    %c0_3 = arith.constant 0 : index
    %3 = vector.load %arg9[%c3, %c0_3] : memref<14x128xf32, #tpu.memory_space<vmem>>, vector<1x32xf32>
    %c4 = arith.constant 4 : index
    %c0_4 = arith.constant 0 : index
    %4 = vector.load %arg9[%c4, %c0_4] : memref<14x128xf32, #tpu.memory_space<vmem>>, vector<1x32xf32>
    %c5 = arith.constant 5 : index
    %c0_5 = arith.constant 0 : index
    %5 = vector.load %arg9[%c5, %c0_5] : memref<14x128xf32, #tpu.memory_space<vmem>>, vector<1x32xf32>
    %c6 = arith.constant 6 : index
    %c0_6 = arith.constant 0 : index
    %6 = vector.load %arg9[%c6, %c0_6] : memref<14x128xf32, #tpu.memory_space<vmem>>, vector<1x16xf32>
    %c7 = arith.constant 7 : index
    %c0_7 = arith.constant 0 : index
    %7 = vector.load %arg9[%c7, %c0_7] : memref<14x128xf32, #tpu.memory_space<vmem>>, vector<1x32xf32>
    %c8 = arith.constant 8 : index
    %c0_8 = arith.constant 0 : index
    %8 = vector.load %arg9[%c8, %c0_8] : memref<14x128xf32, #tpu.memory_space<vmem>>, vector<1x32xf32>
    %c9 = arith.constant 9 : index
    %c0_9 = arith.constant 0 : index
    %9 = vector.load %arg9[%c9, %c0_9] : memref<14x128xf32, #tpu.memory_space<vmem>>, vector<1x32xf32>
    %c10 = arith.constant 10 : index
    %c0_10 = arith.constant 0 : index
    %10 = vector.load %arg9[%c10, %c0_10] : memref<14x128xf32, #tpu.memory_space<vmem>>, vector<1x64xf32>
    %c11 = arith.constant 11 : index
    %c0_11 = arith.constant 0 : index
    %11 = vector.load %arg9[%c11, %c0_11] : memref<14x128xf32, #tpu.memory_space<vmem>>, vector<1x64xf32>
    %c12 = arith.constant 12 : index
    %c0_12 = arith.constant 0 : index
    %12 = vector.load %arg9[%c12, %c0_12] : memref<14x128xf32, #tpu.memory_space<vmem>>, vector<1x64xf32>
    %c13 = arith.constant 13 : index
    %c0_13 = arith.constant 0 : index
    %13 = vector.load %arg9[%c13, %c0_13] : memref<14x128xf32, #tpu.memory_space<vmem>>, vector<1x128xf32>
    %c0_14 = arith.constant 0 : index
    %c0_15 = arith.constant 0 : index
    %14 = vector.load %arg1[%c0_14, %c0_15] : memref<8x40xbf16, #tpu.memory_space<vmem>>, vector<8x32xbf16>
    %c0_16 = arith.constant 0 : index
    %c32 = arith.constant 32 : index
    %15 = vector.load %arg1[%c0_16, %c32] : memref<8x40xbf16, #tpu.memory_space<vmem>>, vector<8x8xbf16>
    %16 = arith.extf %15 : vector<8x8xbf16> to vector<8x8xf32>
    %c0_17 = arith.constant 0 : index
    %c0_18 = arith.constant 0 : index
    %17 = vector.load %arg2[%c0_17, %c0_18] : memref<32x64xbf16, #tpu.memory_space<vmem>>, vector<32x64xbf16>
    %cst = arith.constant dense<0.000000e+00> : vector<8x64xf32>
    %18 = tpu.matmul %14, %17, %cst {dimension_numbers = #tpu.dot_dimension_numbers<[1], [0], [0], [1], [0, 0, 1, 1], [], []>} : vector<8x32xbf16>, vector<32x64xbf16>, vector<8x64xf32> -> vector<8x64xf32>
    %19 = vector.broadcast %0 : vector<1x64xf32> to vector<8x64xf32>
    %20 = arith.addf %18, %19 : vector<8x64xf32>
    %cst_19 = arith.constant dense<0.000000e+00> : vector<8xf32>
    %21 = vector.multi_reduction <add>, %20, %cst_19 [1] : vector<8x64xf32> to vector<8xf32>
    %22 = vector.shape_cast %21 : vector<8xf32> to vector<8x1xf32>
    %cst_20 = arith.constant 6.400000e+01 : f32
    %23 = vector.broadcast %cst_20 : f32 to vector<8x1xf32>
    %24 = arith.divf %22, %23 : vector<8x1xf32>
    %25 = arith.mulf %20, %20 : vector<8x64xf32>
    %cst_21 = arith.constant dense<0.000000e+00> : vector<8xf32>
    %26 = vector.multi_reduction <add>, %25, %cst_21 [1] : vector<8x64xf32> to vector<8xf32>
    %27 = vector.shape_cast %26 : vector<8xf32> to vector<8x1xf32>
    %cst_22 = arith.constant 6.400000e+01 : f32
    %28 = vector.broadcast %cst_22 : f32 to vector<8x1xf32>
    %29 = arith.divf %27, %28 : vector<8x1xf32>
    %30 = arith.mulf %24, %24 : vector<8x1xf32>
    %31 = arith.subf %29, %30 : vector<8x1xf32>
    %cst_23 = arith.constant 0.000000e+00 : f32
    %32 = vector.broadcast %cst_23 : f32 to vector<8x1xf32>
    %33 = arith.maximumf %31, %32 : vector<8x1xf32>
    %34 = vector.broadcast %24 : vector<8x1xf32> to vector<8x64xf32>
    %35 = arith.subf %20, %34 : vector<8x64xf32>
    %cst_24 = arith.constant 9.99999974E-6 : f32
    %36 = vector.broadcast %cst_24 : f32 to vector<8x1xf32>
    %37 = arith.addf %33, %36 : vector<8x1xf32>
    %38 = math.rsqrt %37 : vector<8x1xf32>
    %39 = vector.broadcast %38 : vector<8x1xf32> to vector<8x64xf32>
    %40 = arith.mulf %35, %39 : vector<8x64xf32>
    %41 = vector.broadcast %1 : vector<1x64xf32> to vector<8x64xf32>
    %42 = arith.mulf %40, %41 : vector<8x64xf32>
    %43 = vector.broadcast %2 : vector<1x64xf32> to vector<8x64xf32>
    %44 = arith.addf %42, %43 : vector<8x64xf32>
    %cst_25 = arith.constant 0.000000e+00 : f32
    %45 = vector.broadcast %cst_25 : f32 to vector<8x64xf32>
    %46 = arith.cmpf ogt, %44, %45 : vector<8x64xf32>
    %cst_26 = arith.constant 2.000000e-01 : f32
    %47 = vector.broadcast %cst_26 : f32 to vector<8x64xf32>
    %48 = arith.mulf %47, %44 : vector<8x64xf32>
    %49 = arith.select %46, %44, %48 : vector<8x64xi1>, vector<8x64xf32>
    %50 = arith.truncf %49 : vector<8x64xf32> to vector<8x64xbf16>
    %c0_27 = arith.constant 0 : index
    %c0_28 = arith.constant 0 : index
    %51 = vector.load %arg3[%c0_27, %c0_28] : memref<64x32xbf16, #tpu.memory_space<vmem>>, vector<64x32xbf16>
    %cst_29 = arith.constant dense<0.000000e+00> : vector<8x32xf32>
    %52 = tpu.matmul %50, %51, %cst_29 {dimension_numbers = #tpu.dot_dimension_numbers<[1], [0], [0], [1], [0, 0, 1, 1], [], []>} : vector<8x64xbf16>, vector<64x32xbf16>, vector<8x32xf32> -> vector<8x32xf32>
    %53 = vector.broadcast %3 : vector<1x32xf32> to vector<8x32xf32>
    %54 = arith.addf %52, %53 : vector<8x32xf32>
    %cst_30 = arith.constant dense<0.000000e+00> : vector<8xf32>
    %55 = vector.multi_reduction <add>, %54, %cst_30 [1] : vector<8x32xf32> to vector<8xf32>
    %56 = vector.shape_cast %55 : vector<8xf32> to vector<8x1xf32>
    %cst_31 = arith.constant 3.200000e+01 : f32
    %57 = vector.broadcast %cst_31 : f32 to vector<8x1xf32>
    %58 = arith.divf %56, %57 : vector<8x1xf32>
    %59 = arith.mulf %54, %54 : vector<8x32xf32>
    %cst_32 = arith.constant dense<0.000000e+00> : vector<8xf32>
    %60 = vector.multi_reduction <add>, %59, %cst_32 [1] : vector<8x32xf32> to vector<8xf32>
    %61 = vector.shape_cast %60 : vector<8xf32> to vector<8x1xf32>
    %cst_33 = arith.constant 3.200000e+01 : f32
    %62 = vector.broadcast %cst_33 : f32 to vector<8x1xf32>
    %63 = arith.divf %61, %62 : vector<8x1xf32>
    %64 = arith.mulf %58, %58 : vector<8x1xf32>
    %65 = arith.subf %63, %64 : vector<8x1xf32>
    %cst_34 = arith.constant 0.000000e+00 : f32
    %66 = vector.broadcast %cst_34 : f32 to vector<8x1xf32>
    %67 = arith.maximumf %65, %66 : vector<8x1xf32>
    %68 = vector.broadcast %58 : vector<8x1xf32> to vector<8x32xf32>
    %69 = arith.subf %54, %68 : vector<8x32xf32>
    %cst_35 = arith.constant 9.99999974E-6 : f32
    %70 = vector.broadcast %cst_35 : f32 to vector<8x1xf32>
    %71 = arith.addf %67, %70 : vector<8x1xf32>
    %72 = math.rsqrt %71 : vector<8x1xf32>
    %73 = vector.broadcast %72 : vector<8x1xf32> to vector<8x32xf32>
    %74 = arith.mulf %69, %73 : vector<8x32xf32>
    %75 = vector.broadcast %4 : vector<1x32xf32> to vector<8x32xf32>
    %76 = arith.mulf %74, %75 : vector<8x32xf32>
    %77 = vector.broadcast %5 : vector<1x32xf32> to vector<8x32xf32>
    %78 = arith.addf %76, %77 : vector<8x32xf32>
    %cst_36 = arith.constant 0.000000e+00 : f32
    %79 = vector.broadcast %cst_36 : f32 to vector<8x32xf32>
    %80 = arith.cmpf ogt, %78, %79 : vector<8x32xf32>
    %cst_37 = arith.constant 2.000000e-01 : f32
    %81 = vector.broadcast %cst_37 : f32 to vector<8x32xf32>
    %82 = arith.mulf %81, %78 : vector<8x32xf32>
    %83 = arith.select %80, %78, %82 : vector<8x32xi1>, vector<8x32xf32>
    %84 = arith.truncf %83 : vector<8x32xf32> to vector<8x32xbf16>
    %c0_38 = arith.constant 0 : index
    %c0_39 = arith.constant 0 : index
    %85 = vector.load %arg4[%c0_38, %c0_39] : memref<32x16xbf16, #tpu.memory_space<vmem>>, vector<32x16xbf16>
    %cst_40 = arith.constant dense<0.000000e+00> : vector<8x16xf32>
    %86 = tpu.matmul %84, %85, %cst_40 {dimension_numbers = #tpu.dot_dimension_numbers<[1], [0], [0], [1], [0, 0, 1, 1], [], []>} : vector<8x32xbf16>, vector<32x16xbf16>, vector<8x16xf32> -> vector<8x16xf32>
    %87 = vector.broadcast %6 : vector<1x16xf32> to vector<8x16xf32>
    %88 = arith.addf %86, %87 : vector<8x16xf32>
    %89 = vector.extract_strided_slice %88 {offsets = [0, 0], sizes = [8, 8], strides = [1, 1]} : vector<8x16xf32> to vector<8x8xf32>
    %90 = vector.extract_strided_slice %88 {offsets = [0, 8], sizes = [8, 8], strides = [1, 1]} : vector<8x16xf32> to vector<8x8xf32>
    %cst_41 = arith.constant 5.000000e-01 : f32
    %91 = vector.broadcast %cst_41 : f32 to vector<8x8xf32>
    %92 = arith.mulf %91, %90 : vector<8x8xf32>
    %93 = math.exp %92 : vector<8x8xf32>
    %94 = arith.mulf %16, %93 : vector<8x8xf32>
    %95 = arith.addf %89, %94 : vector<8x8xf32>
    %96 = arith.truncf %95 : vector<8x8xf32> to vector<8x8xbf16>
    %c0_42 = arith.constant 0 : index
    %c0_43 = arith.constant 0 : index
    %97 = vector.load %arg5[%c0_42, %c0_43] : memref<8x32xbf16, #tpu.memory_space<vmem>>, vector<8x32xbf16>
    %cst_44 = arith.constant dense<0.000000e+00> : vector<8x32xf32>
    %98 = tpu.matmul %96, %97, %cst_44 {dimension_numbers = #tpu.dot_dimension_numbers<[1], [0], [0], [1], [0, 0, 1, 1], [], []>} : vector<8x8xbf16>, vector<8x32xbf16>, vector<8x32xf32> -> vector<8x32xf32>
    %99 = vector.broadcast %7 : vector<1x32xf32> to vector<8x32xf32>
    %100 = arith.addf %98, %99 : vector<8x32xf32>
    %cst_45 = arith.constant dense<0.000000e+00> : vector<8xf32>
    %101 = vector.multi_reduction <add>, %100, %cst_45 [1] : vector<8x32xf32> to vector<8xf32>
    %102 = vector.shape_cast %101 : vector<8xf32> to vector<8x1xf32>
    %cst_46 = arith.constant 3.200000e+01 : f32
    %103 = vector.broadcast %cst_46 : f32 to vector<8x1xf32>
    %104 = arith.divf %102, %103 : vector<8x1xf32>
    %105 = arith.mulf %100, %100 : vector<8x32xf32>
    %cst_47 = arith.constant dense<0.000000e+00> : vector<8xf32>
    %106 = vector.multi_reduction <add>, %105, %cst_47 [1] : vector<8x32xf32> to vector<8xf32>
    %107 = vector.shape_cast %106 : vector<8xf32> to vector<8x1xf32>
    %cst_48 = arith.constant 3.200000e+01 : f32
    %108 = vector.broadcast %cst_48 : f32 to vector<8x1xf32>
    %109 = arith.divf %107, %108 : vector<8x1xf32>
    %110 = arith.mulf %104, %104 : vector<8x1xf32>
    %111 = arith.subf %109, %110 : vector<8x1xf32>
    %cst_49 = arith.constant 0.000000e+00 : f32
    %112 = vector.broadcast %cst_49 : f32 to vector<8x1xf32>
    %113 = arith.maximumf %111, %112 : vector<8x1xf32>
    %114 = vector.broadcast %104 : vector<8x1xf32> to vector<8x32xf32>
    %115 = arith.subf %100, %114 : vector<8x32xf32>
    %cst_50 = arith.constant 9.99999974E-6 : f32
    %116 = vector.broadcast %cst_50 : f32 to vector<8x1xf32>
    %117 = arith.addf %113, %116 : vector<8x1xf32>
    %118 = math.rsqrt %117 : vector<8x1xf32>
    %119 = vector.broadcast %118 : vector<8x1xf32> to vector<8x32xf32>
    %120 = arith.mulf %115, %119 : vector<8x32xf32>
    %121 = vector.broadcast %8 : vector<1x32xf32> to vector<8x32xf32>
    %122 = arith.mulf %120, %121 : vector<8x32xf32>
    %123 = vector.broadcast %9 : vector<1x32xf32> to vector<8x32xf32>
    %124 = arith.addf %122, %123 : vector<8x32xf32>
    %cst_51 = arith.constant 0.000000e+00 : f32
    %125 = vector.broadcast %cst_51 : f32 to vector<8x32xf32>
    %126 = arith.cmpf ogt, %124, %125 : vector<8x32xf32>
    %cst_52 = arith.constant 2.000000e-01 : f32
    %127 = vector.broadcast %cst_52 : f32 to vector<8x32xf32>
    %128 = arith.mulf %127, %124 : vector<8x32xf32>
    %129 = arith.select %126, %124, %128 : vector<8x32xi1>, vector<8x32xf32>
    %130 = arith.truncf %129 : vector<8x32xf32> to vector<8x32xbf16>
    %c0_53 = arith.constant 0 : index
    %c0_54 = arith.constant 0 : index
    %131 = vector.load %arg6[%c0_53, %c0_54] : memref<32x64xbf16, #tpu.memory_space<vmem>>, vector<32x64xbf16>
    %cst_55 = arith.constant dense<0.000000e+00> : vector<8x64xf32>
    %132 = tpu.matmul %130, %131, %cst_55 {dimension_numbers = #tpu.dot_dimension_numbers<[1], [0], [0], [1], [0, 0, 1, 1], [], []>} : vector<8x32xbf16>, vector<32x64xbf16>, vector<8x64xf32> -> vector<8x64xf32>
    %133 = vector.broadcast %10 : vector<1x64xf32> to vector<8x64xf32>
    %134 = arith.addf %132, %133 : vector<8x64xf32>
    %cst_56 = arith.constant dense<0.000000e+00> : vector<8xf32>
    %135 = vector.multi_reduction <add>, %134, %cst_56 [1] : vector<8x64xf32> to vector<8xf32>
    %136 = vector.shape_cast %135 : vector<8xf32> to vector<8x1xf32>
    %cst_57 = arith.constant 6.400000e+01 : f32
    %137 = vector.broadcast %cst_57 : f32 to vector<8x1xf32>
    %138 = arith.divf %136, %137 : vector<8x1xf32>
    %139 = arith.mulf %134, %134 : vector<8x64xf32>
    %cst_58 = arith.constant dense<0.000000e+00> : vector<8xf32>
    %140 = vector.multi_reduction <add>, %139, %cst_58 [1] : vector<8x64xf32> to vector<8xf32>
    %141 = vector.shape_cast %140 : vector<8xf32> to vector<8x1xf32>
    %cst_59 = arith.constant 6.400000e+01 : f32
    %142 = vector.broadcast %cst_59 : f32 to vector<8x1xf32>
    %143 = arith.divf %141, %142 : vector<8x1xf32>
    %144 = arith.mulf %138, %138 : vector<8x1xf32>
    %145 = arith.subf %143, %144 : vector<8x1xf32>
    %cst_60 = arith.constant 0.000000e+00 : f32
    %146 = vector.broadcast %cst_60 : f32 to vector<8x1xf32>
    %147 = arith.maximumf %145, %146 : vector<8x1xf32>
    %148 = vector.broadcast %138 : vector<8x1xf32> to vector<8x64xf32>
    %149 = arith.subf %134, %148 : vector<8x64xf32>
    %cst_61 = arith.constant 9.99999974E-6 : f32
    %150 = vector.broadcast %cst_61 : f32 to vector<8x1xf32>
    %151 = arith.addf %147, %150 : vector<8x1xf32>
    %152 = math.rsqrt %151 : vector<8x1xf32>
    %153 = vector.broadcast %152 : vector<8x1xf32> to vector<8x64xf32>
    %154 = arith.mulf %149, %153 : vector<8x64xf32>
    %155 = vector.broadcast %11 : vector<1x64xf32> to vector<8x64xf32>
    %156 = arith.mulf %154, %155 : vector<8x64xf32>
    %157 = vector.broadcast %12 : vector<1x64xf32> to vector<8x64xf32>
    %158 = arith.addf %156, %157 : vector<8x64xf32>
    %cst_62 = arith.constant 0.000000e+00 : f32
    %159 = vector.broadcast %cst_62 : f32 to vector<8x64xf32>
    %160 = arith.cmpf ogt, %158, %159 : vector<8x64xf32>
    %cst_63 = arith.constant 2.000000e-01 : f32
    %161 = vector.broadcast %cst_63 : f32 to vector<8x64xf32>
    %162 = arith.mulf %161, %158 : vector<8x64xf32>
    %163 = arith.select %160, %158, %162 : vector<8x64xi1>, vector<8x64xf32>
    %164 = arith.truncf %163 : vector<8x64xf32> to vector<8x64xbf16>
    %c0_64 = arith.constant 0 : index
    %c0_65 = arith.constant 0 : index
    %165 = vector.load %arg7[%c0_64, %c0_65] : memref<64x128xbf16, #tpu.memory_space<vmem>>, vector<64x128xbf16>
    %cst_66 = arith.constant dense<0.000000e+00> : vector<8x128xf32>
    %166 = tpu.matmul %164, %165, %cst_66 {dimension_numbers = #tpu.dot_dimension_numbers<[1], [0], [0], [1], [0, 0, 1, 1], [], []>} : vector<8x64xbf16>, vector<64x128xbf16>, vector<8x128xf32> -> vector<8x128xf32>
    %167 = arith.truncf %83 : vector<8x32xf32> to vector<8x32xbf16>
    %c0_67 = arith.constant 0 : index
    %c0_68 = arith.constant 0 : index
    %168 = vector.load %arg8[%c0_67, %c0_68] : memref<32x128xbf16, #tpu.memory_space<vmem>>, vector<32x128xbf16>
    %cst_69 = arith.constant dense<0.000000e+00> : vector<8x128xf32>
    %169 = tpu.matmul %167, %168, %cst_69 {dimension_numbers = #tpu.dot_dimension_numbers<[1], [0], [0], [1], [0, 0, 1, 1], [], []>} : vector<8x32xbf16>, vector<32x128xbf16>, vector<8x128xf32> -> vector<8x128xf32>
    %170 = arith.addf %166, %169 : vector<8x128xf32>
    %171 = vector.broadcast %13 : vector<1x128xf32> to vector<8x128xf32>
    %172 = arith.addf %170, %171 : vector<8x128xf32>
    %c0_70 = arith.constant 0 : index
    %c0_71 = arith.constant 0 : index
    %173 = vector.load %arg10[%c0_70, %c0_71] : memref<8x128xf32, #tpu.memory_space<vmem>>, vector<8x128xf32>
    tpu.vector_store %arg10[%c0_70, %c0_71], %172 {strides = array<i32>} : memref<8x128xf32, #tpu.memory_space<vmem>>, vector<8x128xf32>,
    return
  }
  func.func @transform_0(%arg0: i32) -> (i32, i32) {
    %c0_i32 = arith.constant 0 : i32
    %c0_i32_0 = arith.constant 0 : i32
    return %arg0, %c0_i32 : i32, i32
  }
  func.func @transform_1(%arg0: i32) -> (i32, i32) {
    %c0_i32 = arith.constant 0 : i32
    %c0_i32_0 = arith.constant 0 : i32
    %c0_i32_1 = arith.constant 0 : i32
    return %c0_i32, %c0_i32_0 : i32, i32
  }
  func.func @transform_2(%arg0: i32) -> (i32, i32) {
    %c0_i32 = arith.constant 0 : i32
    %c0_i32_0 = arith.constant 0 : i32
    %c0_i32_1 = arith.constant 0 : i32
    return %c0_i32, %c0_i32_0 : i32, i32
  }
  func.func @transform_3(%arg0: i32) -> (i32, i32) {
    %c0_i32 = arith.constant 0 : i32
    %c0_i32_0 = arith.constant 0 : i32
    %c0_i32_1 = arith.constant 0 : i32
    return %c0_i32, %c0_i32_0 : i32, i32
  }
  func.func @transform_4(%arg0: i32) -> (i32, i32) {
    %c0_i32 = arith.constant 0 : i32
    %c0_i32_0 = arith.constant 0 : i32
    %c0_i32_1 = arith.constant 0 : i32
    return %c0_i32, %c0_i32_0 : i32, i32
  }
  func.func @transform_5(%arg0: i32) -> (i32, i32) {
    %c0_i32 = arith.constant 0 : i32
    %c0_i32_0 = arith.constant 0 : i32
    %c0_i32_1 = arith.constant 0 : i32
    return %c0_i32, %c0_i32_0 : i32, i32
  }
  func.func @transform_6(%arg0: i32) -> (i32, i32) {
    %c0_i32 = arith.constant 0 : i32
    %c0_i32_0 = arith.constant 0 : i32
    %c0_i32_1 = arith.constant 0 : i32
    return %c0_i32, %c0_i32_0 : i32, i32
  }
  func.func @transform_7(%arg0: i32) -> (i32, i32) {
    %c0_i32 = arith.constant 0 : i32
    %c0_i32_0 = arith.constant 0 : i32
    %c0_i32_1 = arith.constant 0 : i32
    return %c0_i32, %c0_i32_0 : i32, i32
  }
  func.func @transform_8(%arg0: i32) -> (i32, i32) {
    %c0_i32 = arith.constant 0 : i32
    %c0_i32_0 = arith.constant 0 : i32
    %c0_i32_1 = arith.constant 0 : i32
    return %c0_i32, %c0_i32_0 : i32, i32
  }
  func.func @transform_9(%arg0: i32) -> (i32, i32) {
    %c0_i32 = arith.constant 0 : i32
    %c0_i32_0 = arith.constant 0 : i32
    return %arg0, %c0_i32 : i32, i32
  }
}

</mosaic_0001>

<llo_original>
// kernel: tpu_custom_call.1
$region0: #{tpu_custom_call.1}
  #allocation0 [shape = 'u32[]', space=smem, size = 0x4, offset = 0x4, fixed_abs, tag = 'smem constant byte address 0x4 - core index']
  #allocation1 [shape = 'u32[144,128]{1,0:T(1,128)}', space=vmem, size = 0x12000, scoped, tag = 'internal scratch']
  %s0 = inlined_call_operand.hbm [shape: bf16[8,40], index: 0, kind: input, shape index: {}]
  %s1 = inlined_call_operand.vmem [shape: bf16[32,64], index: 1, kind: input, shape index: {}]
  %s2 = inlined_call_operand.vmem [shape: bf16[64,32], index: 2, kind: input, shape index: {}]
  %s3 = inlined_call_operand.vmem [shape: bf16[32,16], index: 3, kind: input, shape index: {}]
  %s4 = inlined_call_operand.hbm [shape: bf16[8,32], index: 4, kind: input, shape index: {}]
  %s5 = inlined_call_operand.vmem [shape: bf16[32,64], index: 5, kind: input, shape index: {}]
  %s6 = inlined_call_operand.vmem [shape: bf16[64,128], index: 6, kind: input, shape index: {}]
  %s7 = inlined_call_operand.vmem [shape: bf16[32,128], index: 7, kind: input, shape index: {}]
  %s8 = inlined_call_operand.hbm [shape: f32[14,128], index: 8, kind: input, shape index: {}]
  %s9 = inlined_call_operand.hbm [shape: f32[8,128], index: 9, kind: output, shape index: {}]
  %s10 = sld [smem:[#allocation0]]
  $region58: #{tpu_custom_call.1} parent=0
    _
  %s12 = ssub.s32 1, %s10
  %s13 = scalar_select 0, %s12, %s10
  $region1: #{tpu_custom_call.1} parent=0
    #allocation2 [shape = 'u8[2048]{0}', space=vmem, size = 0x800, scoped, tag = 'input window, operand 0, single buffered']
    #allocation3 [shape = 's32[1]{0}', space=sflag, size = 0x4, scoped, tag = 'scoped memory for tpu_custom_call.1']
    #allocation4 [shape = 's32[1]{0}', space=sflag, size = 0x4, scoped, tag = 'scoped memory for tpu_custom_call.1']
    #allocation5 [shape = 'u8[2048]{0}', space=vmem, size = 0x800, scoped, tag = 'input window, operand 4, single buffered']
    #allocation6 [shape = 's32[1]{0}', space=sflag, size = 0x4, scoped, tag = 'scoped memory for tpu_custom_call.1']
    #allocation7 [shape = 'u8[8192]{0}', space=vmem, size = 0x2000, scoped, tag = 'input window, operand 8, single buffered']
    #allocation8 [shape = 'u8[4096]{0}', space=vmem, size = 0x1000, scoped, tag = 'output window, operand 0, single buffered']
    %14 = vsyncpa [#allocation3], 0
    %15 = vsyncpa [#allocation6], 0
    %16 = vsyncpa [#allocation4], 0
    // Predicated region
    $region2: #{tpu_custom_call.1} parent=1 // pred_check
      _
    $region3: #{tpu_custom_call.1} parent=1 // pred_check_branch
      %18 = sbr.rel (0) target = $region5
    $region4: #{tpu_custom_call.1} parent=1 // pred_region
      %s20 = ssub.s32 64, 64
      %21 = vsyncadd [#allocation3], %s20
      %s23 = sshll.u32 [#allocation2], 4
      %s24 = int_to_ptr.vmem [resolvable:$true] %s23
      %26 = dma.hbm_to_vmem [thread:$0]  %s0, 64, %s24, [#allocation3]
    $region5: #{tpu_custom_call.1} parent=1 // pred_fallthru
      _
    // Predicated region
    $region6: #{tpu_custom_call.1} parent=1 // pred_check
      _
    $region7: #{tpu_custom_call.1} parent=1 // pred_check_branch
      %28 = sbr.rel (0) target = $region9
    $region8: #{tpu_custom_call.1} parent=1 // pred_region
      _
    $region9: #{tpu_custom_call.1} parent=1 // pred_fallthru
      _
    // Predicated region
    $region10: #{tpu_custom_call.1} parent=1 // pred_check
      _
    $region11: #{tpu_custom_call.1} parent=1 // pred_check_branch
      %30 = sbr.rel (0) target = $region13
    $region12: #{tpu_custom_call.1} parent=1 // pred_region
      _
    $region13: #{tpu_custom_call.1} parent=1 // pred_fallthru
      _
    // Predicated region
    $region14: #{tpu_custom_call.1} parent=1 // pred_check
      _
    $region15: #{tpu_custom_call.1} parent=1 // pred_check_branch
      %32 = sbr.rel (0) target = $region17
    $region16: #{tpu_custom_call.1} parent=1 // pred_region
      _
    $region17: #{tpu_custom_call.1} parent=1 // pred_fallthru
      _
    // Predicated region
    $region18: #{tpu_custom_call.1} parent=1 // pred_check
      _
    $region19: #{tpu_custom_call.1} parent=1 // pred_check_branch
      %34 = sbr.rel (0) target = $region21
    $region20: #{tpu_custom_call.1} parent=1 // pred_region
      %s36 = ssub.s32 64, 64
      %37 = vsyncadd [#allocation6], %s36
      %s39 = sshll.u32 [#allocation5], 4
      %s40 = int_to_ptr.vmem [resolvable:$true] %s39
      %42 = dma.hbm_to_vmem [thread:$0]  %s4, 64, %s40, [#allocation6]
    $region21: #{tpu_custom_call.1} parent=1 // pred_fallthru
      _
    // Predicated region
    $region22: #{tpu_custom_call.1} parent=1 // pred_check
      _
    $region23: #{tpu_custom_call.1} parent=1 // pred_check_branch
      %44 = sbr.rel (0) target = $region25
    $region24: #{tpu_custom_call.1} parent=1 // pred_region
      _
    $region25: #{tpu_custom_call.1} parent=1 // pred_fallthru
      _
    // Predicated region
    $region26: #{tpu_custom_call.1} parent=1 // pred_check
      _
    $region27: #{tpu_custom_call.1} parent=1 // pred_check_branch
      %46 = sbr.rel (0) target = $region29
    $region28: #{tpu_custom_call.1} parent=1 // pred_region
      _
    $region29: #{tpu_custom_call.1} parent=1 // pred_fallthru
      _
    // Predicated region
    $region30: #{tpu_custom_call.1} parent=1 // pred_check
      _
    $region31: #{tpu_custom_call.1} parent=1 // pred_check_branch
      %48 = sbr.rel (0) target = $region33
    $region32: #{tpu_custom_call.1} parent=1 // pred_region
      _
    $region33: #{tpu_custom_call.1} parent=1 // pred_fallthru
      _
    // Predicated region
    $region34: #{tpu_custom_call.1} parent=1 // pred_check
      _
    $region35: #{tpu_custom_call.1} parent=1 // pred_check_branch
      %50 = sbr.rel (0) target = $region37
    $region36: #{tpu_custom_call.1} parent=1 // pred_region
      %s52 = ssub.s32 256, 256
      %53 = vsyncadd [#allocation6], %s52
      %s54 = sshll.u32 [#allocation7], 4
      %s55 = int_to_ptr.vmem [resolvable:$true] %s54
      %60 = dma.hbm_to_vmem [thread:$0]  %s8, 256, %s55, [#allocation6], 128, 128, 8
    $region37: #{tpu_custom_call.1} parent=1 // pred_fallthru
      _
    // Predicated region
    $region38: #{tpu_custom_call.1} parent=1 // pred_check
      _
    $region39: #{tpu_custom_call.1} parent=1 // pred_check_branch
      %62 = sbr.rel (0) target = $region41
    $region40: #{tpu_custom_call.1} parent=1 // pred_region
      %63 = dma.done [#allocation3], 64
    $region41: #{tpu_custom_call.1} parent=1 // pred_fallthru
      _
    // Predicated region
    $region42: #{tpu_custom_call.1} parent=1 // pred_check
      _
    $region43: #{tpu_custom_call.1} parent=1 // pred_check_branch
      %65 = sbr.rel (0) target = $region45
    $region44: #{tpu_custom_call.1} parent=1 // pred_region
      %66 = dma.done [#allocation6], 64
    $region45: #{tpu_custom_call.1} parent=1 // pred_fallthru
      _
    // Predicated region
    $region46: #{tpu_custom_call.1} parent=1 // pred_check
      _
    $region47: #{tpu_custom_call.1} parent=1 // pred_check_branch
      %68 = sbr.rel (0) target = $region49
    $region48: #{tpu_custom_call.1} parent=1 // pred_region
      %69 = dma.done [#allocation6], 256
    $region49: #{tpu_custom_call.1} parent=1 // pred_fallthru
      _
    %v71 = vld [vmem:[#allocation7] sm:$0x1]
    %v72 = vld [vmem:[#allocation7 + $0x1] sm:$0x1]
    %v73 = vld [vmem:[#allocation7 + $0x2] sm:$0x1]
    %v74 = vld [vmem:[#allocation7 + $0x3] sm:$0x1]
    %v75 = vld [vmem:[#allocation7 + $0x4] sm:$0x1]
    %v76 = vld [vmem:[#allocation7 + $0x5] sm:$0x1]
    %v77 = vld [vmem:[#allocation7 + $0x6] sm:$0x1]
    %v78 = vld [vmem:[#allocation7 + $0x7] sm:$0x1]
    %v79 = vld [vmem:[#allocation7 + $0x8] sm:$0x1]
    %v80 = vld [vmem:[#allocation7 + $0x9] sm:$0x1]
    %v81 = vld [vmem:[#allocation7 + $0xa] sm:$0x1]
    %v82 = vld [vmem:[#allocation7 + $0xb] sm:$0x1]
    %v83 = vld [vmem:[#allocation7 + $0xc] sm:$0x1]
    %v84 = vld [vmem:[#allocation7 + $0xd] sm:$0x1]
    %v85 = vld [vmem:[#allocation2] sm:$0xf]
    %v86 = vunpack.c.l.bf16 %v85
    %v87 = vld [vmem:[%s1] sm:$0xf]
    %v88 = vld [vmem:[%s1 + $0x4] sm:$0xf]
    %v89 = vld [vmem:[%s1 + $0x8] sm:$0xf]
    %v90 = vld [vmem:[%s1 + $0xc] sm:$0xf]
    %v91 = vlaneseq
    %v92 = vshrl.u32 %v91, 7
    %v93 = vsub.s32 0, %v92
    %v94 = vrot.slane %v71, %v93
    %v99 = vunpack.c.l.b16 %v87
    %v100 = vunpack.c.l.b16 %v88
    %v101 = vunpack.c.l.b16 %v89
    %v102 = vunpack.c.l.b16 %v90
    %v103 = vpack.c.b16 %v100, %v99
    %v104 = vpack.c.b16 %v102, %v101
    %vm107 = vcmask 261120
    %v109 = vsel %vm107, %v85, 0
    %111 = vmatprep.subr.bf16.mxu0 0
    %112 = vmatpush1.bf16.msra.mxu0 %v103
    %113 = vmatprep.subr.bf16.mxu0 0
    %114 = vmatpush1.bf16.msra.mxu0 %v104
    %115 = vmatprep.subr.bf16.mxu0 0
    %116 = vmatpush1.bf16.msra.mxu0 0
    %117 = vmatprep.subr.bf16.mxu0 0
    %118 = vmatpush1.bf16.msra.mxu0 0
    %119 = vmatprep.subr.bf16.mxu0 0
    %120 = vmatpush1.bf16.msra.mxu0 0
    %121 = vmatprep.subr.bf16.mxu0 0
    %122 = vmatpush1.bf16.msra.mxu0 0
    %123 = vmatprep.subr.bf16.mxu0 0
    %124 = vmatpush1.bf16.msra.mxu0 0
    %125 = vmatprep.subr.bf16.mxu0 0
    %126 = vmatpush1.bf16.msra.mxu0 0
    %127 = vmatprep.subr.bf16.mxu0 0
    %128 = vmatpush1.bf16.msra.mxu0 0
    %129 = vmatprep.subr.bf16.mxu0 0
    %130 = vmatpush1.bf16.msra.mxu0 0
    %131 = vmatprep.subr.bf16.mxu0 0
    %132 = vmatpush1.bf16.msra.mxu0 0
    %133 = vmatprep.subr.bf16.mxu0 0
    %134 = vmatpush1.bf16.msra.mxu0 0
    %135 = vmatprep.subr.bf16.mxu0 0
    %136 = vmatpush1.bf16.msra.mxu0 0
    %137 = vmatprep.subr.bf16.mxu0 0
    %138 = vmatpush1.bf16.msra.mxu0 0
    %139 = vmatprep.subr.bf16.mxu0 0
    %140 = vmatpush1.bf16.msra.mxu0 0
    %141 = vmatprep.subr.bf16.mxu0 0
    %142 = vmatpush1.bf16.msra.mxu0 0
    %143 = vmatprep.mubr.bf16.mxu0 0
    %144 = vmatmul.mubr.bf16.gmra.mrb[0].mxu0 %v109
    %v145 = vpop.f32.mrb[0].mxu0
    %v146 = vadd.f32 %v94, %v145
    %v147 = vpop.f32.mrb[0].mxu0
    %v148 = vpop.f32.mrb[0].mxu0
    %v149 = vpop.f32.mrb[0].mxu0
    %150 = vdwg.mxu0
    %vm151 = vcmask 523264
    %v152 = vsel %vm151, %v146, 0.0
    %153 = vadd.xlane.f32.xlu0 %v152
    %v154 = vpop.xlane.xlu0 %153
    %v155 = vrcp.pop 64.0
    %v156 = vmul.f32 %v154, %v155
    %v157 = vmul.f32 %v146, %v146
    %v158 = vsel %vm151, %v157, 0.0
    %159 = vadd.xlane.f32.xlu0 %v158
    %v160 = vpop.xlane.xlu0 %159
    %v161 = vmul.f32 %v160, %v155
    %v162 = vmul.f32 %v156, %v156
    %v163 = vsub.f32 %v161, %v162
    %v164 = vmax.f32 %v163, 0.0
    %v165 = vsub.f32 %v146, %v156
    %v166 = vadd.f32 %v164, 1e-05
    %v167 = vrsqrt.pop %v166
    %v168 = vmul.f32 %v165, %v167
    %v169 = vlaneseq
    %v170 = vshrl.u32 %v169, 7
    %v171 = vsub.s32 0, %v170
    %v172 = vrot.slane %v72, %v171
    %v173 = vmul.f32 %v168, %v172
    %v174 = vlaneseq
    %v175 = vshrl.u32 %v174, 7
    %v176 = vsub.s32 0, %v175
    %v177 = vrot.slane %v73, %v176
    %v178 = vadd.f32 %v173, %v177
    %vm179 = vcmp.gt.f32.partialorder %v178, 0.0
    %v180 = vmul.f32 %v178, 0.2
    %v181 = vsel %vm179, %v178, %v180
    %v182 = vpack.c.bf16 %v181, %v181
    %v183 = vld [vmem:[%s2] sm:$0xf]
    %v184 = vld [vmem:[%s2 + $0x4] sm:$0xf]
    %v185 = vld [vmem:[%s2 + $0x8] sm:$0xf]
    %v186 = vld [vmem:[%s2 + $0xc] sm:$0xf]
    %v187 = vld [vmem:[%s2 + $0x10] sm:$0xf]
    %v188 = vld [vmem:[%s2 + $0x14] sm:$0xf]
    %v189 = vld [vmem:[%s2 + $0x18] sm:$0xf]
    %v190 = vld [vmem:[%s2 + $0x1c] sm:$0xf]
    %v191 = vlaneseq
    %v192 = vshrl.u32 %v191, 7
    %v193 = vsub.s32 0, %v192
    %v194 = vrot.slane %v74, %v193
    %v203 = vunpack.c.l.b16 %v183
    %v204 = vunpack.c.l.b16 %v184
    %v205 = vunpack.c.l.b16 %v185
    %v206 = vunpack.c.l.b16 %v186
    %v207 = vunpack.c.l.b16 %v187
    %v208 = vunpack.c.l.b16 %v188
    %v209 = vunpack.c.l.b16 %v189
    %v210 = vunpack.c.l.b16 %v190
    %v211 = vpack.c.b16 %v204, %v203
    %v212 = vpack.c.b16 %v206, %v205
    %v213 = vpack.c.b16 %v208, %v207
    %v214 = vpack.c.b16 %v210, %v209
    %v220 = vsel %vm151, %v182, 0
    %222 = vmatprep.subr.bf16.mxu0 0
    %223 = vmatpush1.bf16.msra.mxu0 %v211
    %224 = vmatprep.subr.bf16.mxu0 0
    %225 = vmatpush1.bf16.msra.mxu0 %v212
    %226 = vmatprep.subr.bf16.mxu0 0
    %227 = vmatpush1.bf16.msra.mxu0 %v213
    %228 = vmatprep.subr.bf16.mxu0 0
    %229 = vmatpush1.bf16.msra.mxu0 %v214
    %230 = vmatprep.subr.bf16.mxu0 0
    %231 = vmatpush1.bf16.msra.mxu0 0
    %232 = vmatprep.subr.bf16.mxu0 0
    %233 = vmatpush1.bf16.msra.mxu0 0
    %234 = vmatprep.subr.bf16.mxu0 0
    %235 = vmatpush1.bf16.msra.mxu0 0
    %236 = vmatprep.subr.bf16.mxu0 0
    %237 = vmatpush1.bf16.msra.mxu0 0
    %238 = vmatprep.subr.bf16.mxu0 0
    %239 = vmatpush1.bf16.msra.mxu0 0
    %240 = vmatprep.subr.bf16.mxu0 0
    %241 = vmatpush1.bf16.msra.mxu0 0
    %242 = vmatprep.subr.bf16.mxu0 0
    %243 = vmatpush1.bf16.msra.mxu0 0
    %244 = vmatprep.subr.bf16.mxu0 0
    %245 = vmatpush1.bf16.msra.mxu0 0
    %246 = vmatprep.subr.bf16.mxu0 0
    %247 = vmatpush1.bf16.msra.mxu0 0
    %248 = vmatprep.subr.bf16.mxu0 0
    %249 = vmatpush1.bf16.msra.mxu0 0
    %250 = vmatprep.subr.bf16.mxu0 0
    %251 = vmatpush1.bf16.msra.mxu0 0
    %252 = vmatprep.subr.bf16.mxu0 0
    %253 = vmatpush1.bf16.msra.mxu0 0
    %254 = vmatprep.mubr.bf16.mxu0 0
    %255 = vmatmul.mubr.bf16.gmra.mrb[0].mxu0 %v220
    %v256 = vpop.f32.mrb[0].mxu0
    %v257 = vadd.f32 %v194, %v256
    %v258 = vpop.f32.mrb[0].mxu0
    %v259 = vpop.f32.mrb[0].mxu0
    %v260 = vpop.f32.mrb[0].mxu0
    %261 = vdwg.mxu0
    %v262 = vsel %vm107, %v257, 0.0
    %263 = vadd.xlane.f32.xlu0 %v262
    %v264 = vpop.xlane.xlu0 %263
    %v265 = vrcp.pop 32.0
    %v266 = vmul.f32 %v264, %v265
    %v267 = vmul.f32 %v257, %v257
    %v268 = vsel %vm107, %v267, 0.0
    %269 = vadd.xlane.f32.xlu0 %v268
    %v270 = vpop.xlane.xlu0 %269
    %v271 = vmul.f32 %v270, %v265
    %v272 = vmul.f32 %v266, %v266
    %v273 = vsub.f32 %v271, %v272
    %v274 = vmax.f32 %v273, 0.0
    %v275 = vsub.f32 %v257, %v266
    %v276 = vadd.f32 %v274, 1e-05
    %v277 = vrsqrt.pop %v276
    %v278 = vmul.f32 %v275, %v277
    %v279 = vlaneseq
    %v280 = vshrl.u32 %v279, 7
    %v281 = vsub.s32 0, %v280
    %v282 = vrot.slane %v75, %v281
    %v283 = vmul.f32 %v278, %v282
    %v284 = vlaneseq
    %v285 = vshrl.u32 %v284, 7
    %v286 = vsub.s32 0, %v285
    %v287 = vrot.slane %v76, %v286
    %v288 = vadd.f32 %v283, %v287
    %vm289 = vcmp.gt.f32.partialorder %v288, 0.0
    %v290 = vmul.f32 %v288, 0.2
    %v291 = vsel %vm289, %v288, %v290
    %v292 = vpack.c.bf16 %v291, %v291
    %v293 = vld [vmem:[%s3] sm:$0xf]
    %v294 = vld [vmem:[%s3 + $0x4] sm:$0xf]
    %v295 = vld [vmem:[%s3 + $0x8] sm:$0xf]
    %v296 = vld [vmem:[%s3 + $0xc] sm:$0xf]
    %v297 = vlaneseq
    %v298 = vshrl.u32 %v297, 7
    %v299 = vsub.s32 0, %v298
    %v300 = vrot.slane %v77, %v299
    %v305 = vunpack.c.l.b16 %v293
    %v306 = vunpack.c.l.b16 %v294
    %v307 = vunpack.c.l.b16 %v295
    %v308 = vunpack.c.l.b16 %v296
    %v309 = vpack.c.b16 %v306, %v305
    %v310 = vpack.c.b16 %v308, %v307
    %v314 = vsel %vm107, %v292, 0
    %316 = vmatprep.subr.bf16.mxu0 0
    %317 = vmatpush1.bf16.msra.mxu0 %v309
    %318 = vmatprep.subr.bf16.mxu0 0
    %319 = vmatpush1.bf16.msra.mxu0 %v310
    %320 = vmatprep.subr.bf16.mxu0 0
    %321 = vmatpush1.bf16.msra.mxu0 0
    %322 = vmatprep.subr.bf16.mxu0 0
    %323 = vmatpush1.bf16.msra.mxu0 0
    %324 = vmatprep.subr.bf16.mxu0 0
    %325 = vmatpush1.bf16.msra.mxu0 0
    %326 = vmatprep.subr.bf16.mxu0 0
    %327 = vmatpush1.bf16.msra.mxu0 0
    %328 = vmatprep.subr.bf16.mxu0 0
    %329 = vmatpush1.bf16.msra.mxu0 0
    %330 = vmatprep.subr.bf16.mxu0 0
    %331 = vmatpush1.bf16.msra.mxu0 0
    %332 = vmatprep.subr.bf16.mxu0 0
    %333 = vmatpush1.bf16.msra.mxu0 0
    %334 = vmatprep.subr.bf16.mxu0 0
    %335 = vmatpush1.bf16.msra.mxu0 0
    %336 = vmatprep.subr.bf16.mxu0 0
    %337 = vmatpush1.bf16.msra.mxu0 0
    %338 = vmatprep.subr.bf16.mxu0 0
    %339 = vmatpush1.bf16.msra.mxu0 0
    %340 = vmatprep.subr.bf16.mxu0 0
    %341 = vmatpush1.bf16.msra.mxu0 0
    %342 = vmatprep.subr.bf16.mxu0 0
    %343 = vmatpush1.bf16.msra.mxu0 0
    %344 = vmatprep.subr.bf16.mxu0 0
    %345 = vmatpush1.bf16.msra.mxu0 0
    %346 = vmatprep.subr.bf16.mxu0 0
    %347 = vmatpush1.bf16.msra.mxu0 0
    %348 = vmatprep.mubr.bf16.mxu0 0
    %349 = vmatmul.mubr.bf16.gmra.mrb[0].mxu0 %v314
    %v350 = vpop.f32.mrb[0].mxu0
    %v351 = vadd.f32 %v300, %v350
    %v352 = vpop.f32.mrb[0].mxu0
    %v353 = vpop.f32.mrb[0].mxu0
    %v354 = vpop.f32.mrb[0].mxu0
    %355 = vdwg.mxu0
    %v356 = vmul.f32 %v351, 0.5
    %v357 = vmul.f32 %v356, 1.442695
    %v358 = vpow.pop %v357
    %360 = vrot.lane.b32.xlu0 %v358, 24
    %v361 = vpop.permute.xlu0 %360
    %v363 = vmul.f32 %v86, %v361
    %365 = vrot.lane.b32.xlu0 %v363, 96
    %v366 = vpop.permute.xlu0 %365
    %v368 = vadd.f32 %v351, %v366
    %v369 = vpack.c.bf16 %v368, %v368
    %v370 = vld [vmem:[#allocation5] sm:$0xf]
    %v371 = vlaneseq
    %v372 = vshrl.u32 %v371, 7
    %v373 = vsub.s32 0, %v372
    %v374 = vrot.slane %v78, %v373
    %vm375 = vcmask 64512
    %v377 = vsel %vm375, %v369, 0
    %vm379 = vcmask 1043456
    %v381 = vsel %vm379, %v370, 0
    %383 = vmatprep.subr.bf16.mxu0 0
    %384 = vmatpush1.bf16.msra.mxu0 %v381
    %385 = vmatprep.subr.bf16.mxu0 0
    %386 = vmatpush1.bf16.msra.mxu0 0
    %387 = vmatprep.subr.bf16.mxu0 0
    %388 = vmatpush1.bf16.msra.mxu0 0
    %389 = vmatprep.subr.bf16.mxu0 0
    %390 = vmatpush1.bf16.msra.mxu0 0
    %391 = vmatprep.subr.bf16.mxu0 0
    %392 = vmatpush1.bf16.msra.mxu0 0
    %393 = vmatprep.subr.bf16.mxu0 0
    %394 = vmatpush1.bf16.msra.mxu0 0
    %395 = vmatprep.subr.bf16.mxu0 0
    %396 = vmatpush1.bf16.msra.mxu0 0
    %397 = vmatprep.subr.bf16.mxu0 0
    %398 = vmatpush1.bf16.msra.mxu0 0
    %399 = vmatprep.subr.bf16.mxu0 0
    %400 = vmatpush1.bf16.msra.mxu0 0
    %401 = vmatprep.subr.bf16.mxu0 0
    %402 = vmatpush1.bf16.msra.mxu0 0
    %403 = vmatprep.subr.bf16.mxu0 0
    %404 = vmatpush1.bf16.msra.mxu0 0
    %405 = vmatprep.subr.bf16.mxu0 0
    %406 = vmatpush1.bf16.msra.mxu0 0
    %407 = vmatprep.subr.bf16.mxu0 0
    %408 = vmatpush1.bf16.msra.mxu0 0
    %409 = vmatprep.subr.bf16.mxu0 0
    %410 = vmatpush1.bf16.msra.mxu0 0
    %411 = vmatprep.subr.bf16.mxu0 0
    %412 = vmatpush1.bf16.msra.mxu0 0
    %413 = vmatprep.subr.bf16.mxu0 0
    %414 = vmatpush1.bf16.msra.mxu0 0
    %415 = vmatprep.mubr.bf16.mxu0 0
    %416 = vmatmul.mubr.bf16.gmra.mrb[0].mxu0 %v377
    %v417 = vpop.f32.mrb[0].mxu0
    %v418 = vadd.f32 %v374, %v417
    %v419 = vpop.f32.mrb[0].mxu0
    %v420 = vpop.f32.mrb[0].mxu0
    %v421 = vpop.f32.mrb[0].mxu0
    %422 = vdwg.mxu0
    %v423 = vsel %vm107, %v418, 0.0
    %424 = vadd.xlane.f32.xlu0 %v423
    %v425 = vpop.xlane.xlu0 %424
    %v426 = vmul.f32 %v425, %v265
    %v427 = vmul.f32 %v418, %v418
    %v428 = vsel %vm107, %v427, 0.0
    %429 = vadd.xlane.f32.xlu0 %v428
    %v430 = vpop.xlane.xlu0 %429
    %v431 = vmul.f32 %v430, %v265
    %v432 = vmul.f32 %v426, %v426
    %v433 = vsub.f32 %v431, %v432
    %v434 = vmax.f32 %v433, 0.0
    %v435 = vsub.f32 %v418, %v426
    %v436 = vadd.f32 %v434, 1e-05
    %v437 = vrsqrt.pop %v436
    %v438 = vmul.f32 %v435, %v437
    %v439 = vlaneseq
    %v440 = vshrl.u32 %v439, 7
    %v441 = vsub.s32 0, %v440
    %v442 = vrot.slane %v79, %v441
    %v443 = vmul.f32 %v438, %v442
    %v444 = vlaneseq
    %v445 = vshrl.u32 %v444, 7
    %v446 = vsub.s32 0, %v445
    %v447 = vrot.slane %v80, %v446
    %v448 = vadd.f32 %v443, %v447
    %vm449 = vcmp.gt.f32.partialorder %v448, 0.0
    %v450 = vmul.f32 %v448, 0.2
    %v451 = vsel %vm449, %v448, %v450
    %v452 = vpack.c.bf16 %v451, %v451
    %v453 = vld [vmem:[%s5] sm:$0xf]
    %v454 = vld [vmem:[%s5 + $0x4] sm:$0xf]
    %v455 = vld [vmem:[%s5 + $0x8] sm:$0xf]
    %v456 = vld [vmem:[%s5 + $0xc] sm:$0xf]
    %v457 = vlaneseq
    %v458 = vshrl.u32 %v457, 7
    %v459 = vsub.s32 0, %v458
    %v460 = vrot.slane %v81, %v459
    %v465 = vunpack.c.l.b16 %v453
    %v466 = vunpack.c.l.b16 %v454
    %v467 = vunpack.c.l.b16 %v455
    %v468 = vunpack.c.l.b16 %v456
    %v469 = vpack.c.b16 %v466, %v465
    %v470 = vpack.c.b16 %v468, %v467
    %v474 = vsel %vm107, %v452, 0
    %476 = vmatprep.subr.bf16.mxu0 0
    %477 = vmatpush1.bf16.msra.mxu0 %v469
    %478 = vmatprep.subr.bf16.mxu0 0
    %479 = vmatpush1.bf16.msra.mxu0 %v470
    %480 = vmatprep.subr.bf16.mxu0 0
    %481 = vmatpush1.bf16.msra.mxu0 0
    %482 = vmatprep.subr.bf16.mxu0 0
    %483 = vmatpush1.bf16.msra.mxu0 0
    %484 = vmatprep.subr.bf16.mxu0 0
    %485 = vmatpush1.bf16.msra.mxu0 0
    %486 = vmatprep.subr.bf16.mxu0 0
    %487 = vmatpush1.bf16.msra.mxu0 0
    %488 = vmatprep.subr.bf16.mxu0 0
    %489 = vmatpush1.bf16.msra.mxu0 0
    %490 = vmatprep.subr.bf16.mxu0 0
    %491 = vmatpush1.bf16.msra.mxu0 0
    %492 = vmatprep.subr.bf16.mxu0 0
    %493 = vmatpush1.bf16.msra.mxu0 0
    %494 = vmatprep.subr.bf16.mxu0 0
    %495 = vmatpush1.bf16.msra.mxu0 0
    %496 = vmatprep.subr.bf16.mxu0 0
    %497 = vmatpush1.bf16.msra.mxu0 0
    %498 = vmatprep.subr.bf16.mxu0 0
    %499 = vmatpush1.bf16.msra.mxu0 0
    %500 = vmatprep.subr.bf16.mxu0 0
    %501 = vmatpush1.bf16.msra.mxu0 0
    %502 = vmatprep.subr.bf16.mxu0 0
    %503 = vmatpush1.bf16.msra.mxu0 0
    %504 = vmatprep.subr.bf16.mxu0 0
    %505 = vmatpush1.bf16.msra.mxu0 0
    %506 = vmatprep.subr.bf16.mxu0 0
    %507 = vmatpush1.bf16.msra.mxu0 0
    %508 = vmatprep.mubr.bf16.mxu0 0
    %509 = vmatmul.mubr.bf16.gmra.mrb[0].mxu0 %v474
    %v510 = vpop.f32.mrb[0].mxu0
    %v511 = vadd.f32 %v460, %v510
    %v512 = vpop.f32.mrb[0].mxu0
    %v513 = vpop.f32.mrb[0].mxu0
    %v514 = vpop.f32.mrb[0].mxu0
    %515 = vdwg.mxu0
    %v516 = vsel %vm151, %v511, 0.0
    %517 = vadd.xlane.f32.xlu0 %v516
    %v518 = vpop.xlane.xlu0 %517
    %v519 = vmul.f32 %v518, %v155
    %v520 = vmul.f32 %v511, %v511
    %v521 = vsel %vm151, %v520, 0.0
    %522 = vadd.xlane.f32.xlu0 %v521
    %v523 = vpop.xlane.xlu0 %522
    %v524 = vmul.f32 %v523, %v155
    %v525 = vmul.f32 %v519, %v519
    %v526 = vsub.f32 %v524, %v525
    %v527 = vmax.f32 %v526, 0.0
    %v528 = vsub.f32 %v511, %v519
    %v529 = vadd.f32 %v527, 1e-05
    %v530 = vrsqrt.pop %v529
    %v531 = vmul.f32 %v528, %v530
    %v532 = vlaneseq
    %v533 = vshrl.u32 %v532, 7
    %v534 = vsub.s32 0, %v533
    %v535 = vrot.slane %v82, %v534
    %v536 = vmul.f32 %v531, %v535
    %v537 = vlaneseq
    %v538 = vshrl.u32 %v537, 7
    %v539 = vsub.s32 0, %v538
    %v540 = vrot.slane %v83, %v539
    %v541 = vadd.f32 %v536, %v540
    %vm542 = vcmp.gt.f32.partialorder %v541, 0.0
    %v543 = vmul.f32 %v541, 0.2
    %v544 = vsel %vm542, %v541, %v543
    %v545 = vpack.c.bf16 %v544, %v544
    %v546 = vld [vmem:[%s6] sm:$0xf]
    %v547 = vld [vmem:[%s6 + $0x4] sm:$0xf]
    %v548 = vld [vmem:[%s6 + $0x8] sm:$0xf]
    %v549 = vld [vmem:[%s6 + $0xc] sm:$0xf]
    %v550 = vld [vmem:[%s6 + $0x10] sm:$0xf]
    %v551 = vld [vmem:[%s6 + $0x14] sm:$0xf]
    %v552 = vld [vmem:[%s6 + $0x18] sm:$0xf]
    %v553 = vld [vmem:[%s6 + $0x1c] sm:$0xf]
    %v554 = vld [vmem:[%s7] sm:$0xf]
    %v555 = vld [vmem:[%s7 + $0x4] sm:$0xf]
    %v556 = vld [vmem:[%s7 + $0x8] sm:$0xf]
    %v557 = vld [vmem:[%s7 + $0xc] sm:$0xf]
    %v562 = vunpack.c.l.b16 %v554
    %v563 = vunpack.c.l.b16 %v555
    %v564 = vunpack.c.l.b16 %v556
    %v565 = vunpack.c.l.b16 %v557
    %v566 = vpack.c.b16 %v563, %v562
    %v567 = vpack.c.b16 %v565, %v564
    %570 = vmatprep.subr.bf16.mxu0 0
    %571 = vmatpush1.bf16.msra.mxu0 %v566
    %572 = vmatprep.subr.bf16.mxu0 0
    %573 = vmatpush1.bf16.msra.mxu0 %v567
    %574 = vmatprep.subr.bf16.mxu0 0
    %575 = vmatpush1.bf16.msra.mxu0 0
    %576 = vmatprep.subr.bf16.mxu0 0
    %577 = vmatpush1.bf16.msra.mxu0 0
    %578 = vmatprep.subr.bf16.mxu0 0
    %579 = vmatpush1.bf16.msra.mxu0 0
    %580 = vmatprep.subr.bf16.mxu0 0
    %581 = vmatpush1.bf16.msra.mxu0 0
    %582 = vmatprep.subr.bf16.mxu0 0
    %583 = vmatpush1.bf16.msra.mxu0 0
    %584 = vmatprep.subr.bf16.mxu0 0
    %585 = vmatpush1.bf16.msra.mxu0 0
    %586 = vmatprep.subr.bf16.mxu0 0
    %587 = vmatpush1.bf16.msra.mxu0 0
    %588 = vmatprep.subr.bf16.mxu0 0
    %589 = vmatpush1.bf16.msra.mxu0 0
    %590 = vmatprep.subr.bf16.mxu0 0
    %591 = vmatpush1.bf16.msra.mxu0 0
    %592 = vmatprep.subr.bf16.mxu0 0
    %593 = vmatpush1.bf16.msra.mxu0 0
    %594 = vmatprep.subr.bf16.mxu0 0
    %595 = vmatpush1.bf16.msra.mxu0 0
    %596 = vmatprep.subr.bf16.mxu0 0
    %597 = vmatpush1.bf16.msra.mxu0 0
    %598 = vmatprep.subr.bf16.mxu0 0
    %599 = vmatpush1.bf16.msra.mxu0 0
    %600 = vmatprep.subr.bf16.mxu0 0
    %601 = vmatpush1.bf16.msra.mxu0 0
    %602 = vmatprep.mubr.bf16.mxu0 0
    %603 = vmatmul.mubr.bf16.gmra.mrb[0].mxu0 %v314
    %v604 = vpop.f32.mrb[0].mxu0
    %v605 = vadd.f32 0.0, %v604
    %v606 = vpop.f32.mrb[0].mxu0
    %v607 = vpop.f32.mrb[0].mxu0
    %v608 = vpop.f32.mrb[0].mxu0
    %609 = vdwg.mxu0
    %v618 = vunpack.c.l.b16 %v546
    %v619 = vunpack.c.l.b16 %v547
    %v620 = vunpack.c.l.b16 %v548
    %v621 = vunpack.c.l.b16 %v549
    %v622 = vunpack.c.l.b16 %v550
    %v623 = vunpack.c.l.b16 %v551
    %v624 = vunpack.c.l.b16 %v552
    %v625 = vunpack.c.l.b16 %v553
    %v626 = vpack.c.b16 %v619, %v618
    %v627 = vpack.c.b16 %v621, %v620
    %v628 = vpack.c.b16 %v623, %v622
    %v629 = vpack.c.b16 %v625, %v624
    %v635 = vsel %vm151, %v545, 0
    %637 = vmatprep.subr.bf16.mxu0 0
    %638 = vmatpush1.bf16.msra.mxu0 %v626
    %639 = vmatprep.subr.bf16.mxu0 0
    %640 = vmatpush1.bf16.msra.mxu0 %v627
    %641 = vmatprep.subr.bf16.mxu0 0
    %642 = vmatpush1.bf16.msra.mxu0 %v628
    %643 = vmatprep.subr.bf16.mxu0 0
    %644 = vmatpush1.bf16.msra.mxu0 %v629
    %645 = vmatprep.subr.bf16.mxu0 0
    %646 = vmatpush1.bf16.msra.mxu0 0
    %647 = vmatprep.subr.bf16.mxu0 0
    %648 = vmatpush1.bf16.msra.mxu0 0
    %649 = vmatprep.subr.bf16.mxu0 0
    %650 = vmatpush1.bf16.msra.mxu0 0
    %651 = vmatprep.subr.bf16.mxu0 0
    %652 = vmatpush1.bf16.msra.mxu0 0
    %653 = vmatprep.subr.bf16.mxu0 0
    %654 = vmatpush1.bf16.msra.mxu0 0
    %655 = vmatprep.subr.bf16.mxu0 0
    %656 = vmatpush1.bf16.msra.mxu0 0
    %657 = vmatprep.subr.bf16.mxu0 0
    %658 = vmatpush1.bf16.msra.mxu0 0
    %659 = vmatprep.subr.bf16.mxu0 0
    %660 = vmatpush1.bf16.msra.mxu0 0
    %661 = vmatprep.subr.bf16.mxu0 0
    %662 = vmatpush1.bf16.msra.mxu0 0
    %663 = vmatprep.subr.bf16.mxu0 0
    %664 = vmatpush1.bf16.msra.mxu0 0
    %665 = vmatprep.subr.bf16.mxu0 0
    %666 = vmatpush1.bf16.msra.mxu0 0
    %667 = vmatprep.subr.bf16.mxu0 0
    %668 = vmatpush1.bf16.msra.mxu0 0
    %669 = vmatprep.mubr.bf16.mxu0 0
    %670 = vmatmul.mubr.bf16.gmra.mrb[0].mxu0 %v635
    %v671 = vpop.f32.mrb[0].mxu0
    %v672 = vadd.f32 %v605, %v671
    %v673 = vpop.f32.mrb[0].mxu0
    %v674 = vpop.f32.mrb[0].mxu0
    %v675 = vpop.f32.mrb[0].mxu0
    %676 = vdwg.mxu0
    %v677 = vlaneseq
    %v678 = vshrl.u32 %v677, 7
    %v679 = vsub.s32 0, %v678
    %v680 = vrot.slane %v84, %v679
    %v681 = vadd.f32 %v672, %v680
    %682 = vst [vmem:[#allocation8] sm:$0xff] %v681
    // Predicated region
    $region50: #{tpu_custom_call.1} parent=1 // pred_check
      _
    $region51: #{tpu_custom_call.1} parent=1 // pred_check_branch
      %684 = sbr.rel (0) target = $region53
    $region52: #{tpu_custom_call.1} parent=1 // pred_region
      %s686 = ssub.s32 128, 128
      %687 = vsyncadd [#allocation4], %s686
      %s689 = sshll.u32 [#allocation8], 4
      %s690 = int_to_ptr.vmem [resolvable:$true] %s689
      %692 = dma.vmem_to_hbm [thread:$0]  %s690, 128, %s9, [#allocation4]
    $region53: #{tpu_custom_call.1} parent=1 // pred_fallthru
      _
    // Predicated region
    $region54: #{tpu_custom_call.1} parent=1 // pred_check
      _
    $region55: #{tpu_custom_call.1} parent=1 // pred_check_branch
      %694 = sbr.rel (0) target = $region57
    $region56: #{tpu_custom_call.1} parent=1 // pred_region
      %695 = dma.done [#allocation4], 128
    $region57: #{tpu_custom_call.1} parent=1 // pred_fallthru
      _
    %696 = vsyncpa [#allocation3], 1
    %697 = vsyncpa [#allocation6], 1
    %698 = vsyncpa [#allocation4], 1

</llo_original>
